<compile_context>
chip_gen: v7x
topology: tpu7x:2x2x1
jax: 0.10.0
libtpu: 0.0.40
codegen_flags: <defaults>
</compile_context>

<pallas_src>
import functools
import math

import jax
import jax.numpy as jnp
from jax.experimental import pallas as pl
from jax.experimental.pallas import tpu as pltpu


def _repeat_kernel(xi_ref, o_ref):
    # xi_ref: (1, lane_w) block, resident in VMEM across the whole grid
    # (constant-index BlockSpec -> no per-step re-DMA of the input).
    # o_ref:  (row_tile, lane_w) output block — sublane broadcast + stores.
    o_ref[...] = jnp.broadcast_to(xi_ref[...], o_ref.shape)


def _sublane_multiple(dtype) -> int:
    # f32 -> 8, bf16/f16 -> 16, int8/fp8 -> 32: sub-32-bit dtypes pack along
    # sublanes, so row tiles must align to the packed sublane count.
    itemsize = jnp.dtype(dtype).itemsize
    return max(8, 8 * (4 // max(itemsize, 1)))


@functools.lru_cache(maxsize=1)
def _vmem_capacity_bytes() -> int:
    """Per-TensorCore VMEM capacity; conservative (v7x) fallback on failure."""
    try:
        info = pltpu.get_tpu_info()
        for name in ("vmem_capacity_bytes", "vmem_size_bytes", "vmem_bytes"):
            v = getattr(info, name, None)
            if v:
                return int(v)
    except Exception:
        pass
    return 64 << 20


def _generation_defaults():
    """(vmem_cap, target_block_bytes, min_pallas_bytes) tuned per chip class."""
    vmem_cap = _vmem_capacity_bytes()
    if vmem_cap <= (64 << 20):
        # v7x-class: 64 MiB VMEM/TC, ~3.2 TB/s HBM -> bigger threshold,
        # 16 MiB blocks (2 x 16 MiB double-buffered output well under VMEM).
        return vmem_cap, 16 << 20, 16 << 20
    # v5e / v6e: 128 MiB VMEM -> 24 MiB blocks, 8 MiB Pallas threshold.
    return vmem_cap, 24 << 20, 8 << 20


def _repeat_pallas(xi_row: jax.Array, rows: int, *,
                   target_block_bytes: int, vmem_cap: int) -> jax.Array:
    """Repeat xi_row (shape (1, lane_w)) over `rows` rows -> (rows, lane_w)."""
    lane_w = xi_row.shape[1]
    dtype = xi_row.dtype
    itemsize = jnp.dtype(dtype).itemsize
    lane_pad = pl.cdiv(lane_w, 128) * 128          # VMEM lane padding

    # --- Row tile sizing ---------------------------------------------------
    sub = _sublane_multiple(dtype)
    row_tile = max(sub, target_block_bytes // (lane_pad * itemsize))
    # Guarantee >= 4 grid steps when rows allow it (>= 2 per TensorCore on
    # v7x with "parallel" semantics) so both cores stream and the pipeline
    # keeps fill / write-back overlapped; never collapse to a 1-step grid.
    if rows >= 4 * sub:
        row_tile = min(row_tile, pl.cdiv(rows, 4))
    elif rows >= 2 * sub:
        row_tile = min(row_tile, pl.cdiv(rows, 2))
    row_tile = max(sub, (row_tile // sub) * sub)   # sublane-align (round down)
    row_tile = min(row_tile, rows)

    # --- VMEM limit sized from actual (lane-padded) block bytes -------------
    out_block_bytes = row_tile * lane_pad * itemsize
    in_block_bytes = sub * lane_pad * itemsize
    vmem_limit = 2 * out_block_bytes + 2 * in_block_bytes + (4 << 20)
    vmem_limit = max(vmem_limit, 16 << 20)
    vmem_limit = min(vmem_limit, vmem_cap - (8 << 20))   # headroom for Mosaic

    grid = (pl.cdiv(rows, row_tile),)

    return pl.pallas_call(
        _repeat_kernel,
        out_shape=jax.ShapeDtypeStruct((rows, lane_w), dtype),
        grid_spec=pltpu.PrefetchScalarGridSpec(
            num_scalar_prefetch=0,
            grid=grid,
            in_specs=[
                # Constant block index -> xi stays resident in VMEM; the only
                # HBM traffic is the output write stream.
                pl.BlockSpec((1, lane_w), lambda i: (0, 0)),
            ],
            out_specs=pl.BlockSpec((row_tile, lane_w), lambda i: (i, 0)),
        ),
        compiler_params=pltpu.CompilerParams(
            dimension_semantics=("parallel",),
            vmem_limit_bytes=int(vmem_limit),
        ),
    )(xi_row)


def random_coefficients_forward(xi: jax.Array, input_size: int,
                                *,
                                target_block_bytes: int | None = None,
                                min_pallas_bytes: int | None = None) -> jax.Array:
    """Returns xi repeated along rows: shape (input_size, nkl), same dtype as xi."""
    assert xi.ndim == 2 and xi.shape[0] == 1
    nkl = xi.shape[1]
    dtype = xi.dtype
    itemsize = jnp.dtype(dtype).itemsize
    total_bytes = input_size * nkl * itemsize

    vmem_cap, default_block, default_min = _generation_defaults()
    if target_block_bytes is None:
        target_block_bytes = default_block
    if min_pallas_bytes is None:
        min_pallas_bytes = default_min

    # Small problem: Pallas dispatch + grid priming would dominate a few-MiB
    # HBM write; XLA's fused broadcast is effectively free (and often avoids
    # materialization entirely by fusing into the consumer).
    if input_size <= 0 or total_bytes < min_pallas_bytes:
        return jnp.broadcast_to(xi, (max(input_size, 0), nkl))

    # --- Already lane-dense --------------------------------------------------
    if nkl % 128 == 0:
        return _repeat_pallas(xi, input_size,
                              target_block_bytes=target_block_bytes,
                              vmem_cap=vmem_cap)

    # --- Lane-dense folding: fold `fold` logical rows into one physical row
    # of width lane_w = fold * nkl (a multiple of 128) -> full-width vst.
    fold = 128 // math.gcd(nkl, 128)
    lane_w = nkl * fold
    xi_wide = jnp.tile(xi, (1, fold))              # (1, lane_w)

    if input_size % fold == 0:
        out = _repeat_pallas(xi_wide, input_size // fold,
                             target_block_bytes=target_block_bytes,
                             vmem_cap=vmem_cap)
        return out.reshape(input_size, nkl)        # row-major reshape: free

    # input_size not divisible by fold: choose between
    #   (a) single-pass masked stores on the exact (input_size, nkl) output
    #       (HBM DMA is still contiguous; only the VMEM fill is lane-sparse),
    #   (b) lane-dense bulk + tiny (< fold rows) broadcast tail + concatenate
    #       (costs one extra read+write pass over the output).
    # (a) wins unless lane occupancy is low enough that the masked fill rate
    # drops under the HBM write roofline (~< 1/3 occupancy).
    lane_pad = pl.cdiv(nkl, 128) * 128
    occupancy = nkl / lane_pad
    if occupancy >= (1.0 / 3.0):
        return _repeat_pallas(xi, input_size,
                              target_block_bytes=target_block_bytes,
                              vmem_cap=vmem_cap)

    main_rows = (input_size // fold) * fold
    tail_rows = input_size - main_rows
    if main_rows == 0:
        return jnp.broadcast_to(xi, (input_size, nkl))
    main = _repeat_pallas(xi_wide, main_rows // fold,
                          target_block_bytes=target_block_bytes,
                          vmem_cap=vmem_cap).reshape(main_rows, nkl)
    tail = jnp.broadcast_to(xi, (tail_rows, nkl))
    return jnp.concatenate([main, tail], axis=0)


if __name__ == "__main__":
    key = jax.random.PRNGKey(0)
    k1, k2 = jax.random.split(key)

    # PyTorch module inits xi to zeros; use a deterministic random fill so the
    # correctness checks are non-trivial.
    nkl = 32
    xi = jax.random.normal(k1, (1, nkl), dtype=jnp.float32)

    # 1) Small shape consistent with the module (default thresholds -> fused
    #    broadcast fallback path).
    small = jax.block_until_ready(random_coefficients_forward(xi, 16))
    assert small.shape == (16, nkl) and small.dtype == xi.dtype
    assert jnp.array_equal(small, jnp.tile(xi, (16, 1)))

    # 2) Force the Pallas kernel on the lane-dense folded path:
    #    fold=4 -> physical output (4096, 128), grid=(4,).
    big = jax.block_until_ready(
        random_coefficients_forward(xi, 16384, min_pallas_bytes=0))
    assert big.shape == (16384, nkl) and big.dtype == xi.dtype
    assert jnp.array_equal(big, jnp.tile(xi, (16384, 1)))

    # 3) Non-divisible tail with low lane occupancy (32/128 < 1/3):
    #    lane-dense bulk through the kernel + 3-row tail concatenated.
    odd = jax.block_until_ready(
        random_coefficients_forward(xi, 16387, min_pallas_bytes=0))
    assert odd.shape == (16387, nkl) and odd.dtype == xi.dtype
    assert jnp.array_equal(odd, jnp.tile(xi, (16387, 1)))

    # 4) nkl not a multiple of 128 with high lane occupancy (100/128) and a
    #    non-divisible input_size: single-pass masked-store path.
    nkl2 = 100
    xi2 = jax.random.normal(k2, (1, nkl2), dtype=jnp.float32)
    msk = jax.block_until_ready(
        random_coefficients_forward(xi2, 1601, min_pallas_bytes=0))
    assert msk.shape == (1601, nkl2) and msk.dtype == xi2.dtype
    assert jnp.array_equal(msk, jnp.tile(xi2, (1601, 1)))

    print("KERNEL_OK")
</pallas_src>

<mosaic_0001>
module attributes {stable_mosaic.version = 11 : i64} {
  func.func @_repeat_kernel(%arg0: i32, %arg1: memref<1x128xf32, #tpu.memory_space<vmem>>, %arg2: memref<1024x128xf32, #tpu.memory_space<vmem>>) attributes {dimension_semantics = [#tpu.dimension_semantics<parallel>], iteration_bounds = array<i64: 4>, scalar_prefetch = 0 : i64, scratch_operands = 0 : i64, tpu.core_type = #tpu.core_type<tc>, window_params = [{pipeline_mode = #tpu.pipeline_mode<synchronous>, transform_indices = @transform_0, window_bounds = array<i64: 1, 128>}, {transform_indices = @transform_1, window_bounds = array<i64: 1024, 128>}]} {
    %c0 = arith.constant 0 : index
    %c0_0 = arith.constant 0 : index
    %0 = vector.load %arg1[%c0, %c0_0] : memref<1x128xf32, #tpu.memory_space<vmem>>, vector<1x128xf32>
    %1 = vector.shape_cast %0 : vector<1x128xf32> to vector<1x128xf32>
    %2 = vector.broadcast %1 : vector<1x128xf32> to vector<1024x128xf32>
    %c0_1 = arith.constant 0 : index
    %c0_2 = arith.constant 0 : index
    %3 = vector.load %arg2[%c0_1, %c0_2] : memref<1024x128xf32, #tpu.memory_space<vmem>>, vector<1024x128xf32>
    tpu.vector_store %arg2[%c0_1, %c0_2], %2 {strides = array<i32>} : memref<1024x128xf32, #tpu.memory_space<vmem>>, vector<1024x128xf32>,
    return
  }
  func.func @transform_0(%arg0: i32) -> (i32, i32) {
    %c0_i32 = arith.constant 0 : i32
    %c0_i32_0 = arith.constant 0 : i32
    %c0_i32_1 = arith.constant 0 : i32
    return %c0_i32, %c0_i32_0 : i32, i32
  }
  func.func @transform_1(%arg0: i32) -> (i32, i32) {
    %c0_i32 = arith.constant 0 : i32
    %c0_i32_0 = arith.constant 0 : i32
    return %arg0, %c0_i32 : i32, i32
  }
}

</mosaic_0001>

<llo_original>
// kernel: tpu_custom_call.1
$region0: #{tpu_custom_call.1}
  #allocation0 [shape = 'u32[]', space=smem, size = 0x4, offset = 0x4, fixed_abs, tag = 'smem constant byte address 0x4 - core index']
  #allocation1 [shape = 'u32[144,128]{1,0:T(1,128)}', space=vmem, size = 0x12000, scoped, tag = 'internal scratch']
  %s0 = inlined_call_operand.hbm [shape: f32[1,128], index: 0, kind: input, shape index: {}]
  %s1 = inlined_call_operand.hbm [shape: f32[4096,128], index: 1, kind: output, shape index: {}]
  %s2 = sld [smem:[#allocation0]]
  $region41: #{tpu_custom_call.1} parent=0
    _
  %s4 = ssub.s32 1, %s2
  %s5 = scalar_select 0, %s4, %s2
  $region1: #{tpu_custom_call.1} parent=0
    #allocation2 [shape = 'u8[512]{0}', space=vmem, size = 0x400, scoped, tag = 'input window, operand 0, single buffered']
    #allocation3 [shape = 's32[2]{0}', space=sflag, size = 0x8, scoped, tag = 'scoped memory for tpu_custom_call.1']
    #allocation4 [shape = 's32[2]{0}', space=sflag, size = 0x8, scoped, tag = 'scoped memory for tpu_custom_call.1']
    #allocation5 [shape = 'u8[1048576]{0}', space=vmem, size = 0x100000, scoped, tag = 'output window, operand 0']
    %6 = vsyncpa [#allocation3], 0
    %7 = vsyncpa [#allocation4], 0
    %s8 = scalar_lea.sflag [#allocation4], 1
    %9 = vsyncpa %s8, 0
    loop: start=0, step=1, limit=6
    $region2: #{tpu_custom_call.1} parent=1 // loop_pre_header
      _
    $region3: #{tpu_custom_call.1} parent=1 // loop_header
      %s11 = sphi 0, %s15
      %p12 = scmp.ge.s32.totalorder %s11, 6
      %s19 = sphi 0, %s19
      %s21 = sphi 0, %s19
      %s22 = sphi 0, %s21
      %s36 = sphi 0, %s22
      %s42 = sphi 0, %s44
      %s45 = sphi 0, %s42
      %s46 = sphi 0, %s45
      %s62 = sphi 0, %s46
    $region4: #{tpu_custom_call.1} parent=1 // loop_header_branch
      %14 = sbr.rel (%p12) target = $region8
    $region5: #{tpu_custom_call.1} parent=1 // loop_body
      %s16 = ssub.s32 %s11, 1
      %s17 = ssub.s32 %s11, 2
      %s18 = sadd.s32 %s11, 1
      %s20 = sadd.s32 %s19, 1
      %p23 = scmp.eq.s32.totalorder %s11, 3
      %p24 = scmp.ne.s32.totalorder %s19, %s21
      %p25 = scmp.eq.s32.totalorder %s11, 0
      %p26 = por %p24, %p25
      %p27 = scmp.ne.s32.totalorder %s19, %s21
      %p28 = scmp.eq.s32.totalorder %s16, 3
      %p29 = por %p27, %p28
      %p30 = scmp.ne.s32.totalorder %s21, %s22
      %p31 = scmp.eq.s32.totalorder %s16, 0
      %p32 = por %p30, %p31
      %p33 = scmp.ne.s32.totalorder %s21, %s22
      %p34 = scmp.eq.s32.totalorder %s17, 3
      %p35 = por %p33, %p34
      %p37 = scmp.ne.s32.totalorder %s22, %s36
      %p38 = scmp.eq.s32.totalorder %s17, 0
      %p39 = por %p37, %p38
      %s40 = ssub.s32 %s11, %s18
      %p41 = scmp.eq.s32.totalorder %s40, 0
      %s43 = sadd.s32 %s42, 1
      %s44 = scalar_select %p41, %s42, %s43
      %p47 = pneg %p41
      %p48 = scmp.eq.s32.totalorder %s11, 3
      %p49 = por %p47, %p48
      %p50 = scmp.ne.s32.totalorder %s42, %s45
      %p51 = scmp.eq.s32.totalorder %s11, 0
      %p52 = por %p50, %p51
      %p53 = scmp.ne.s32.totalorder %s42, %s45
      %p54 = scmp.eq.s32.totalorder %s16, 3
      %p55 = por %p53, %p54
      %p56 = scmp.ne.s32.totalorder %s45, %s46
      %p57 = scmp.eq.s32.totalorder %s16, 0
      %p58 = por %p56, %p57
      %p59 = scmp.ne.s32.totalorder %s45, %s46
      %p60 = scmp.eq.s32.totalorder %s17, 3
      %p61 = por %p59, %p60
      %p63 = scmp.ne.s32.totalorder %s46, %s62
      %p64 = scmp.eq.s32.totalorder %s17, 0
      %p65 = por %p63, %p64
      %p66 = scmp.le.s32.totalorder 1, %s11
      %p67 = scmp.lt.s32.totalorder %s11, 5
      %p68 = pnand %p66, %p67
      %p69 = pneg %p68
      // Predicated region
      $region9: #{tpu_custom_call.1} parent=5 // pred_check
        _
      $region10: #{tpu_custom_call.1} parent=5 // pred_check_branch
        %71 = sbr.rel (%p68) target = $region12
      $region11: #{tpu_custom_call.1} parent=5 // pred_region
        %s72 = ssub.s32 %s11, 1
        // Predicated region
        $region13: #{tpu_custom_call.1} parent=11 // pred_check
          %p73 = pneg %p32
        $region14: #{tpu_custom_call.1} parent=11 // pred_check_branch
          %75 = sbr.rel (%p73) target = $region16
        $region15: #{tpu_custom_call.1} parent=11 // pred_region
          %s77 = ssub.s32 16, 16
          %78 = vsyncadd [#allocation3], %s77
          %s80 = sshll.u32 [#allocation2], 4
          %s81 = int_to_ptr.vmem [resolvable:$true] %s80
          %83 = dma.hbm_to_vmem [thread:$0]  %s0, 16, %s81, [#allocation3]
        $region16: #{tpu_custom_call.1} parent=11 // pred_fallthru
          _
      $region12: #{tpu_custom_call.1} parent=5 // pred_fallthru
        _
      %p84 = scmp.lt.s32.totalorder %s11, 4
      // Predicated region
      $region17: #{tpu_custom_call.1} parent=5 // pred_check
        %p85 = pneg %p84
      $region18: #{tpu_custom_call.1} parent=5 // pred_check_branch
        %87 = sbr.rel (%p85) target = $region20
      $region19: #{tpu_custom_call.1} parent=5 // pred_region
        _
      $region20: #{tpu_custom_call.1} parent=5 // pred_fallthru
        _
      %p88 = scmp.le.s32.totalorder 1, %s11
      %p89 = scmp.lt.s32.totalorder %s11, 5
      %p90 = pnand %p88, %p89
      %p91 = pneg %p90
      // Predicated region
      $region21: #{tpu_custom_call.1} parent=5 // pred_check
        _
      $region22: #{tpu_custom_call.1} parent=5 // pred_check_branch
        %93 = sbr.rel (%p90) target = $region24
      $region23: #{tpu_custom_call.1} parent=5 // pred_region
        %s94 = ssub.s32 %s11, 1
        // Predicated region
        $region25: #{tpu_custom_call.1} parent=23 // pred_check
          %p95 = pneg %p32
        $region26: #{tpu_custom_call.1} parent=23 // pred_check_branch
          %97 = sbr.rel (%p95) target = $region28
        $region27: #{tpu_custom_call.1} parent=23 // pred_region
          %98 = dma.done [#allocation3], 16
        $region28: #{tpu_custom_call.1} parent=23 // pred_fallthru
          _
        %p99 = pneg %p32
        %p100 = pneg %p29
        %p101 = pneg %p58
        %p102 = pneg %p55
        %s103 = sand.u32 %s45, 1
        %s104 = scalar_lea.sflag [#allocation4], %s103
        %s105 = sand.u32 %s45, 1
        %s106 = smul.addr %s105, 1024
        %s107 = scalar_lea.vmem [#allocation5], %s106
        %s108 = smul.u32 128, %s16
        %v109 = vld [vmem:[#allocation2] sm:$0x1]
        %v111 = vlaneseq
        %v112 = vshrl.u32 %v111, 7
        %v113 = vsub.s32 0, %v112
        %v114 = vrot.slane %v109, %v113
        %116 = vst [vmem:[%s107] sm:$0xff] %v114
        %117 = vst [vmem:[%s107 + $0x8] sm:$0xff] %v114
        %118 = vst [vmem:[%s107 + $0x10] sm:$0xff] %v114
        %119 = vst [vmem:[%s107 + $0x18] sm:$0xff] %v114
        %120 = vst [vmem:[%s107 + $0x20] sm:$0xff] %v114
        %121 = vst [vmem:[%s107 + $0x28] sm:$0xff] %v114
        %122 = vst [vmem:[%s107 + $0x30] sm:$0xff] %v114
        %123 = vst [vmem:[%s107 + $0x38] sm:$0xff] %v114
        %124 = vst [vmem:[%s107 + $0x40] sm:$0xff] %v114
        %125 = vst [vmem:[%s107 + $0x48] sm:$0xff] %v114
        %126 = vst [vmem:[%s107 + $0x50] sm:$0xff] %v114
        %127 = vst [vmem:[%s107 + $0x58] sm:$0xff] %v114
        %128 = vst [vmem:[%s107 + $0x60] sm:$0xff] %v114
        %129 = vst [vmem:[%s107 + $0x68] sm:$0xff] %v114
        %130 = vst [vmem:[%s107 + $0x70] sm:$0xff] %v114
        %131 = vst [vmem:[%s107 + $0x78] sm:$0xff] %v114
        %132 = vst [vmem:[%s107 + $0x80] sm:$0xff] %v114
        %133 = vst [vmem:[%s107 + $0x88] sm:$0xff] %v114
        %134 = vst [vmem:[%s107 + $0x90] sm:$0xff] %v114
        %135 = vst [vmem:[%s107 + $0x98] sm:$0xff] %v114
        %136 = vst [vmem:[%s107 + $0xa0] sm:$0xff] %v114
        %137 = vst [vmem:[%s107 + $0xa8] sm:$0xff] %v114
        %138 = vst [vmem:[%s107 + $0xb0] sm:$0xff] %v114
        %139 = vst [vmem:[%s107 + $0xb8] sm:$0xff] %v114
        %140 = vst [vmem:[%s107 + $0xc0] sm:$0xff] %v114
        %141 = vst [vmem:[%s107 + $0xc8] sm:$0xff] %v114
        %142 = vst [vmem:[%s107 + $0xd0] sm:$0xff] %v114
        %143 = vst [vmem:[%s107 + $0xd8] sm:$0xff] %v114
        %144 = vst [vmem:[%s107 + $0xe0] sm:$0xff] %v114
        %145 = vst [vmem:[%s107 + $0xe8] sm:$0xff] %v114
        %146 = vst [vmem:[%s107 + $0xf0] sm:$0xff] %v114
        %147 = vst [vmem:[%s107 + $0xf8] sm:$0xff] %v114
        %148 = vst [vmem:[%s107 + $0x100] sm:$0xff] %v114
        %149 = vst [vmem:[%s107 + $0x108] sm:$0xff] %v114
        %150 = vst [vmem:[%s107 + $0x110] sm:$0xff] %v114
        %151 = vst [vmem:[%s107 + $0x118] sm:$0xff] %v114
        %152 = vst [vmem:[%s107 + $0x120] sm:$0xff] %v114
        %153 = vst [vmem:[%s107 + $0x128] sm:$0xff] %v114
        %154 = vst [vmem:[%s107 + $0x130] sm:$0xff] %v114
        %155 = vst [vmem:[%s107 + $0x138] sm:$0xff] %v114
        %156 = vst [vmem:[%s107 + $0x140] sm:$0xff] %v114
        %157 = vst [vmem:[%s107 + $0x148] sm:$0xff] %v114
        %158 = vst [vmem:[%s107 + $0x150] sm:$0xff] %v114
        %159 = vst [vmem:[%s107 + $0x158] sm:$0xff] %v114
        %160 = vst [vmem:[%s107 + $0x160] sm:$0xff] %v114
        %161 = vst [vmem:[%s107 + $0x168] sm:$0xff] %v114
        %162 = vst [vmem:[%s107 + $0x170] sm:$0xff] %v114
        %163 = vst [vmem:[%s107 + $0x178] sm:$0xff] %v114
        %164 = vst [vmem:[%s107 + $0x180] sm:$0xff] %v114
        %165 = vst [vmem:[%s107 + $0x188] sm:$0xff] %v114
        %166 = vst [vmem:[%s107 + $0x190] sm:$0xff] %v114
        %167 = vst [vmem:[%s107 + $0x198] sm:$0xff] %v114
        %168 = vst [vmem:[%s107 + $0x1a0] sm:$0xff] %v114
        %169 = vst [vmem:[%s107 + $0x1a8] sm:$0xff] %v114
        %170 = vst [vmem:[%s107 + $0x1b0] sm:$0xff] %v114
        %171 = vst [vmem:[%s107 + $0x1b8] sm:$0xff] %v114
        %172 = vst [vmem:[%s107 + $0x1c0] sm:$0xff] %v114
        %173 = vst [vmem:[%s107 + $0x1c8] sm:$0xff] %v114
        %174 = vst [vmem:[%s107 + $0x1d0] sm:$0xff] %v114
        %175 = vst [vmem:[%s107 + $0x1d8] sm:$0xff] %v114
        %176 = vst [vmem:[%s107 + $0x1e0] sm:$0xff] %v114
        %177 = vst [vmem:[%s107 + $0x1e8] sm:$0xff] %v114
        %178 = vst [vmem:[%s107 + $0x1f0] sm:$0xff] %v114
        %179 = vst [vmem:[%s107 + $0x1f8] sm:$0xff] %v114
        %180 = vst [vmem:[%s107 + $0x200] sm:$0xff] %v114
        %181 = vst [vmem:[%s107 + $0x208] sm:$0xff] %v114
        %182 = vst [vmem:[%s107 + $0x210] sm:$0xff] %v114
        %183 = vst [vmem:[%s107 + $0x218] sm:$0xff] %v114
        %184 = vst [vmem:[%s107 + $0x220] sm:$0xff] %v114
        %185 = vst [vmem:[%s107 + $0x228] sm:$0xff] %v114
        %186 = vst [vmem:[%s107 + $0x230] sm:$0xff] %v114
        %187 = vst [vmem:[%s107 + $0x238] sm:$0xff] %v114
        %188 = vst [vmem:[%s107 + $0x240] sm:$0xff] %v114
        %189 = vst [vmem:[%s107 + $0x248] sm:$0xff] %v114
        %190 = vst [vmem:[%s107 + $0x250] sm:$0xff] %v114
        %191 = vst [vmem:[%s107 + $0x258] sm:$0xff] %v114
        %192 = vst [vmem:[%s107 + $0x260] sm:$0xff] %v114
        %193 = vst [vmem:[%s107 + $0x268] sm:$0xff] %v114
        %194 = vst [vmem:[%s107 + $0x270] sm:$0xff] %v114
        %195 = vst [vmem:[%s107 + $0x278] sm:$0xff] %v114
        %196 = vst [vmem:[%s107 + $0x280] sm:$0xff] %v114
        %197 = vst [vmem:[%s107 + $0x288] sm:$0xff] %v114
        %198 = vst [vmem:[%s107 + $0x290] sm:$0xff] %v114
        %199 = vst [vmem:[%s107 + $0x298] sm:$0xff] %v114
        %200 = vst [vmem:[%s107 + $0x2a0] sm:$0xff] %v114
        %201 = vst [vmem:[%s107 + $0x2a8] sm:$0xff] %v114
        %202 = vst [vmem:[%s107 + $0x2b0] sm:$0xff] %v114
        %203 = vst [vmem:[%s107 + $0x2b8] sm:$0xff] %v114
        %204 = vst [vmem:[%s107 + $0x2c0] sm:$0xff] %v114
        %205 = vst [vmem:[%s107 + $0x2c8] sm:$0xff] %v114
        %206 = vst [vmem:[%s107 + $0x2d0] sm:$0xff] %v114
        %207 = vst [vmem:[%s107 + $0x2d8] sm:$0xff] %v114
        %208 = vst [vmem:[%s107 + $0x2e0] sm:$0xff] %v114
        %209 = vst [vmem:[%s107 + $0x2e8] sm:$0xff] %v114
        %210 = vst [vmem:[%s107 + $0x2f0] sm:$0xff] %v114
        %211 = vst [vmem:[%s107 + $0x2f8] sm:$0xff] %v114
        %212 = vst [vmem:[%s107 + $0x300] sm:$0xff] %v114
        %213 = vst [vmem:[%s107 + $0x308] sm:$0xff] %v114
        %214 = vst [vmem:[%s107 + $0x310] sm:$0xff] %v114
        %215 = vst [vmem:[%s107 + $0x318] sm:$0xff] %v114
        %216 = vst [vmem:[%s107 + $0x320] sm:$0xff] %v114
        %217 = vst [vmem:[%s107 + $0x328] sm:$0xff] %v114
        %218 = vst [vmem:[%s107 + $0x330] sm:$0xff] %v114
        %219 = vst [vmem:[%s107 + $0x338] sm:$0xff] %v114
        %220 = vst [vmem:[%s107 + $0x340] sm:$0xff] %v114
        %221 = vst [vmem:[%s107 + $0x348] sm:$0xff] %v114
        %222 = vst [vmem:[%s107 + $0x350] sm:$0xff] %v114
        %223 = vst [vmem:[%s107 + $0x358] sm:$0xff] %v114
        %224 = vst [vmem:[%s107 + $0x360] sm:$0xff] %v114
        %225 = vst [vmem:[%s107 + $0x368] sm:$0xff] %v114
        %226 = vst [vmem:[%s107 + $0x370] sm:$0xff] %v114
        %227 = vst [vmem:[%s107 + $0x378] sm:$0xff] %v114
        %228 = vst [vmem:[%s107 + $0x380] sm:$0xff] %v114
        %229 = vst [vmem:[%s107 + $0x388] sm:$0xff] %v114
        %230 = vst [vmem:[%s107 + $0x390] sm:$0xff] %v114
        %231 = vst [vmem:[%s107 + $0x398] sm:$0xff] %v114
        %232 = vst [vmem:[%s107 + $0x3a0] sm:$0xff] %v114
        %233 = vst [vmem:[%s107 + $0x3a8] sm:$0xff] %v114
        %234 = vst [vmem:[%s107 + $0x3b0] sm:$0xff] %v114
        %235 = vst [vmem:[%s107 + $0x3b8] sm:$0xff] %v114
        %236 = vst [vmem:[%s107 + $0x3c0] sm:$0xff] %v114
        %237 = vst [vmem:[%s107 + $0x3c8] sm:$0xff] %v114
        %238 = vst [vmem:[%s107 + $0x3d0] sm:$0xff] %v114
        %239 = vst [vmem:[%s107 + $0x3d8] sm:$0xff] %v114
        %240 = vst [vmem:[%s107 + $0x3e0] sm:$0xff] %v114
        %241 = vst [vmem:[%s107 + $0x3e8] sm:$0xff] %v114
        %242 = vst [vmem:[%s107 + $0x3f0] sm:$0xff] %v114
        %243 = vst [vmem:[%s107 + $0x3f8] sm:$0xff] %v114
        %s244 = sand.u32 %s45, 1
        %s245 = scalar_lea.sflag [#allocation4], %s244
        %s246 = sand.u32 %s45, 1
        %s247 = smul.addr %s246, 1024
        %s248 = scalar_lea.vmem [#allocation5], %s247
        // Predicated region
        $region29: #{tpu_custom_call.1} parent=23 // pred_check
          %p249 = pneg %p55
        $region30: #{tpu_custom_call.1} parent=23 // pred_check_branch
          %251 = sbr.rel (%p249) target = $region32
        $region31: #{tpu_custom_call.1} parent=23 // pred_region
          %s252 = smul.u32 128, %s16
          %s254 = ssub.s32 16384, 16384
          %255 = vsyncadd %s245, %s254
          %s256 = smul.addr %s252, 128
          %s257 = scalar_lea.hbm %s1, %s256
          %s258 = sshll.u32 %s248, 4
          %s259 = int_to_ptr.vmem [resolvable:$true] %s258
          %264 = dma.vmem_to_hbm [thread:$0]  %s259, 16384, %s257, %s245, 128, 128, 8
        $region32: #{tpu_custom_call.1} parent=23 // pred_fallthru
          _
      $region24: #{tpu_custom_call.1} parent=5 // pred_fallthru
        _
      %p265 = scmp.le.s32.totalorder 2, %s11
      // Predicated region
      $region33: #{tpu_custom_call.1} parent=5 // pred_check
        %p266 = pneg %p265
      $region34: #{tpu_custom_call.1} parent=5 // pred_check_branch
        %268 = sbr.rel (%p266) target = $region36
      $region35: #{tpu_custom_call.1} parent=5 // pred_region
        %s269 = ssub.s32 %s11, 2
        // Predicated region
        $region37: #{tpu_custom_call.1} parent=35 // pred_check
          %p270 = pneg %p61
        $region38: #{tpu_custom_call.1} parent=35 // pred_check_branch
          %272 = sbr.rel (%p270) target = $region40
        $region39: #{tpu_custom_call.1} parent=35 // pred_region
          %s273 = sand.u32 %s46, 1
          %s274 = scalar_lea.sflag [#allocation4], %s273
          %s275 = sand.u32 %s46, 1
          %s276 = smul.addr %s275, 1024
          %s277 = scalar_lea.vmem [#allocation5], %s276
          %278 = dma.done %s274, 16384
        $region40: #{tpu_custom_call.1} parent=35 // pred_fallthru
          _
      $region36: #{tpu_custom_call.1} parent=5 // pred_fallthru
        _
    $region6: #{tpu_custom_call.1} parent=1 // loop_footer
      %s15 = sadd.s32 1, %s11
    $region7: #{tpu_custom_call.1} parent=1 // loop_footer_branch
      %10 = sbr.rel target = $region3
    $region8: #{tpu_custom_call.1} parent=1 // loop_exit
      _
    %279 = vsyncpa [#allocation3], 1
    %s280 = scalar_lea.sflag [#allocation3], 1
    %281 = vsyncpa %s280, 1
    %282 = vsyncpa [#allocation4], 1
    %s283 = scalar_lea.sflag [#allocation4], 1
    %284 = vsyncpa %s283, 1

</llo_original>
